<compile_context>
chip_gen: v6e
topology: v6e:2x2x1
jax: 0.10.0
libtpu: 0.0.40
codegen_flags: <defaults>
</compile_context>

<pallas_src>
import functools

import jax
import jax.numpy as jnp
from jax import lax
from jax.experimental import pallas as pl
from jax.experimental.pallas import tpu as pltpu

THRESH = 0.5
EPSILON = 0.1
SCALE_POS = 2.0
SCALE_NEG = 50.0
_NEG_BIG = -1e30   # sims live in [-1, 1]; big finite sentinels are exact here
_POS_BIG = 1e30
_HAS_CUT = 1e29    # threshold to detect "at least one pos/neg exists"


def _round_up(x, m):
    return ((x + m - 1) // m) * m


def _ms_loss_kernel(emb_ref, lab_rows_ref, lab_cols_ref, out_ref, *, tile_m, n_real):
    pid = pl.program_id(0)
    nsteps = pl.num_programs(0)

    @pl.when(pid == 0)
    def _init():
        out_ref[...] = jnp.zeros_like(out_ref)

    # ---- L2-normalize (rsqrt + mul; clamp squared norm to keep F.normalize eps semantics) ----
    e_all = emb_ref[...]                                               # (N_pad, D) resident block
    inv_all = lax.rsqrt(jnp.maximum(jnp.sum(e_all * e_all, axis=-1, keepdims=True), 1e-24))
    en_all = e_all * inv_all

    row0 = pl.multiple_of(pid * tile_m, tile_m)
    e_rows = emb_ref[pl.ds(row0, tile_m), :]                           # (TILE_M, D)
    inv_rows = lax.rsqrt(jnp.maximum(jnp.sum(e_rows * e_rows, axis=-1, keepdims=True), 1e-24))
    en_rows = e_rows * inv_rows

    # ---- sim slab: (TILE_M, N_pad) via NT contraction (no explicit transpose of en_all) ----
    sim = lax.dot_general(en_rows, en_all, (((1,), (1,)), ((), ())),
                          preferred_element_type=jnp.float32)

    # ---- masks ----
    lr = lab_rows_ref[...]                                             # (TILE_M, 1) int32
    lc = lab_cols_ref[...]                                             # (1, N_pad)  int32
    same = lr == lc                                                    # (TILE_M, N_pad)
    g_row = row0 + lax.broadcasted_iota(jnp.int32, sim.shape, 0)
    g_col = lax.broadcasted_iota(jnp.int32, sim.shape, 1)
    diag = g_row == g_col
    n_pad = sim.shape[1]
    if n_real == n_pad:                                                # static: skip pad masking
        pos_mask = same & (~diag)
        neg_mask = ~same
    else:
        valid = (g_col < n_real) & (g_row < n_real)
        pos_mask = same & (~diag) & valid
        neg_mask = (~same) & valid

    # ---- MultiSimilarityMiner ----
    max_neg = jnp.max(jnp.where(neg_mask, sim, _NEG_BIG), axis=1, keepdims=True)   # (T, 1)
    min_pos = jnp.min(jnp.where(pos_mask, sim, _POS_BIG), axis=1, keepdims=True)   # (T, 1)
    mined_pos = pos_mask & ((sim - EPSILON) < max_neg)
    mined_neg = neg_mask & ((sim + EPSILON) > min_pos)

    # "any mined pair" predicates, reusing the row extrema (the min-sim positive / max-sim
    # negative is always mined whenever any is mined):
    has_pos = ((min_pos - EPSILON) < max_neg) & (min_pos < _HAS_CUT)
    has_neg = ((max_neg + EPSILON) > min_pos) & (max_neg > -_HAS_CUT)

    # ---- MultiSimilarityLoss: stabilized add-one LSE per anchor ----
    # Stabilizers come straight from the extrema (max over mined z), no extra row reductions.
    m_pos = jnp.maximum(SCALE_POS * (THRESH - min_pos), 0.0)           # (T, 1)
    m_neg = jnp.maximum(SCALE_NEG * (max_neg - THRESH), 0.0)           # (T, 1)

    zp = jnp.where(mined_pos, SCALE_POS * (THRESH - sim), _NEG_BIG)    # mask folded once
    zn = jnp.where(mined_neg, SCALE_NEG * (sim - THRESH), _NEG_BIG)
    sp = jnp.sum(jnp.exp(zp - m_pos), axis=1, keepdims=True)           # exp(-1e30) -> 0
    sn = jnp.sum(jnp.exp(zn - m_neg), axis=1, keepdims=True)

    lse_p = m_pos + jnp.log(sp + jnp.exp(-m_pos))                      # log(1 + sum exp(z))
    lse_n = m_neg + jnp.log(sn + jnp.exp(-m_neg))

    pos_loss = jnp.where(has_pos, lse_p, 0.0) * (1.0 / SCALE_POS)      # (T, 1)
    neg_loss = jnp.where(has_neg, lse_n, 0.0) * (1.0 / SCALE_NEG)

    # ---- accumulate into the resident (1,1) output block; scale by 1/N on the last step ----
    out_ref[...] += jnp.sum(pos_loss + neg_loss, axis=0, keepdims=True)

    @pl.when(pid == nsteps - 1)
    def _finalize():
        out_ref[...] = out_ref[...] * (1.0 / n_real)


def multi_similarity_loss(embeddings, labels, *, tile_m=None):
    # TODO(synk): the PyTorch miner early-returns empty pairs when no pos/neg pairs exist at
    # all (loss would be 0); here that data-dependent branch is handled implicitly by the
    # per-anchor masks (same result for non-degenerate batches).
    n, d = embeddings.shape
    if tile_m is None:
        # Largest row slab that keeps the (TILE_M, N) f32 slab + intermediates in VMEM on all
        # generations; 256 rows is sized for v7x's 64 MiB physical VMEM (v5e/v6e have more).
        tile_m = max(8, min(256, _round_up(n, 8)))
    tile_m = _round_up(int(tile_m), 8)
    n_pad = _round_up(n, tile_m)

    emb = embeddings.astype(jnp.float32)
    lab = labels.astype(jnp.int32).reshape(-1)
    if n_pad != n:
        emb = jnp.pad(emb, ((0, n_pad - n), (0, 0)))
        lab = jnp.pad(lab, (0, n_pad - n), constant_values=-1)
    lab_rows = lab.reshape(n_pad, 1)   # per-row-tile labels: tiny (TILE_M, 1) block per step
    lab_cols = lab.reshape(1, n_pad)   # lane-dense column labels: one resident block

    kernel = functools.partial(_ms_loss_kernel, tile_m=tile_m, n_real=n)

    out = pl.pallas_call(
        kernel,
        out_shape=jax.ShapeDtypeStruct((1, 1), jnp.float32),
        grid=(n_pad // tile_m,),
        in_specs=[
            pl.BlockSpec((n_pad, d), lambda i: (0, 0)),     # embeddings: resident full block
            pl.BlockSpec((tile_m, 1), lambda i: (i, 0)),    # row-tile labels
            pl.BlockSpec((1, n_pad), lambda i: (0, 0)),     # lane-dense column labels
        ],
        out_specs=pl.BlockSpec((1, 1), lambda i: (0, 0)),   # resident scalar accumulator
        compiler_params=pltpu.CompilerParams(
            # The row axis accumulates into the resident (1,1) output block, so it must stay
            # "arbitrary"; a per-tile output + host-side mean would allow "parallel" megacore
            # sharding on v7x.
            dimension_semantics=("arbitrary",),
            vmem_limit_bytes=48 * 1024 * 1024,
        ),
        cost_estimate=pl.CostEstimate(
            flops=2 * n_pad * n_pad * d,
            transcendentals=2 * n_pad * n_pad,
            bytes_accessed=n_pad * d * 4 + 2 * n_pad * 4 + 4,
        ),
    )(emb, lab_rows, lab_cols)
    return out[0, 0]


def _reference_loss(embeddings, labels):
    # Pure-JAX reference of the same math (for a sanity check).
    e = embeddings.astype(jnp.float32)
    en = e / jnp.maximum(jnp.linalg.norm(e, axis=-1, keepdims=True), 1e-12)
    sim = en @ en.T
    n = sim.shape[0]
    same = labels[:, None] == labels[None, :]
    diag = jnp.eye(n, dtype=bool)
    pos_mask = same & ~diag
    neg_mask = ~same
    max_neg = jnp.max(jnp.where(neg_mask, sim, _NEG_BIG), axis=1, keepdims=True)
    min_pos = jnp.min(jnp.where(pos_mask, sim, _POS_BIG), axis=1, keepdims=True)
    mined_pos = pos_mask & ((sim - EPSILON) < max_neg)
    mined_neg = neg_mask & ((sim + EPSILON) > min_pos)

    def lse1(z, mask):
        s = jnp.sum(jnp.where(mask, jnp.exp(z), 0.0), axis=1)
        has = jnp.any(mask, axis=1)
        return jnp.where(has, jnp.log1p(s), 0.0)

    pos = lse1(SCALE_POS * (THRESH - sim), mined_pos) / SCALE_POS
    neg = lse1(SCALE_NEG * (sim - THRESH), mined_neg) / SCALE_NEG
    return jnp.mean(pos + neg)


if __name__ == "__main__":
    key = jax.random.PRNGKey(0)
    k1, k2 = jax.random.split(key)

    # Case 1: single-tile path.
    N, D = 8, 32
    embeddings = jax.random.normal(k1, (N, D), dtype=jnp.float32)
    labels = jnp.array([0, 0, 1, 1, 2, 2, 3, 3], dtype=jnp.int32)
    loss = multi_similarity_loss(embeddings, labels)
    jax.block_until_ready(loss)
    ref = _reference_loss(embeddings, labels)
    assert jnp.allclose(loss, ref, rtol=1e-4, atol=1e-5), (loss, ref)

    # Case 2: multi-tile grid + row/column padding + singleton classes (empty positive rows).
    N2, D2 = 12, 32
    emb2 = jax.random.normal(k2, (N2, D2), dtype=jnp.float32)
    lab2 = jnp.array([0, 0, 1, 1, 2, 2, 3, 3, 4, 5, 6, 6], dtype=jnp.int32)
    loss2 = multi_similarity_loss(emb2, lab2, tile_m=8)   # grid=(2,), N padded 12 -> 16
    jax.block_until_ready(loss2)
    ref2 = _reference_loss(emb2, lab2)
    assert jnp.allclose(loss2, ref2, rtol=1e-4, atol=1e-5), (loss2, ref2)

    print("KERNEL_OK")
</pallas_src>

<mosaic_0001>
module attributes {stable_mosaic.version = 11 : i64} {
  func.func @_ms_loss_kernel(%arg0: i32, %arg1: memref<8x32xf32, #tpu.memory_space<vmem>>, %arg2: memref<8x1xi32, #tpu.memory_space<vmem>>, %arg3: memref<1x8xi32, #tpu.memory_space<vmem>>, %arg4: memref<1x1xf32, #tpu.memory_space<vmem>>) attributes {dimension_semantics = [#tpu.dimension_semantics<arbitrary>], iteration_bounds = array<i64: 1>, scalar_prefetch = 0 : i64, scratch_operands = 0 : i64, tpu.core_type = #tpu.core_type<tc>, window_params = [{pipeline_mode = #tpu.pipeline_mode<synchronous>, transform_indices = @transform_0, window_bounds = array<i64: 8, 32>}, {transform_indices = @transform_1, window_bounds = array<i64: 8, 1>}, {pipeline_mode = #tpu.pipeline_mode<synchronous>, transform_indices = @transform_2, window_bounds = array<i64: 1, 8>}, {pipeline_mode = #tpu.pipeline_mode<synchronous>, transform_indices = @transform_3, window_bounds = array<i64: 1, 1>}]} {
    %c0_i32 = arith.constant 0 : i32
    %0 = arith.cmpi eq, %arg0, %c0_i32 : i32
    %1 = arith.extui %0 : i1 to i32
    %c0_i32_0 = arith.constant 0 : i32
    %2 = arith.cmpi ne, %1, %c0_i32_0 : i32
    scf.if %2 {
      %cst_50 = arith.constant 0.000000e+00 : f32
      %131 = vector.broadcast %cst_50 : f32 to vector<1x1xf32>
      %c0_51 = arith.constant 0 : index
      %c0_52 = arith.constant 0 : index
      %132 = vector.load %arg4[%c0_51, %c0_52] : memref<1x1xf32, #tpu.memory_space<vmem>>, vector<1x1xf32>
      tpu.vector_store %arg4[%c0_51, %c0_52], %131 {strides = array<i32>} : memref<1x1xf32, #tpu.memory_space<vmem>>, vector<1x1xf32>,
    } else {
    }
    %c0 = arith.constant 0 : index
    %c0_1 = arith.constant 0 : index
    %3 = vector.load %arg1[%c0, %c0_1] : memref<8x32xf32, #tpu.memory_space<vmem>>, vector<8x32xf32>
    %4 = arith.mulf %3, %3 : vector<8x32xf32>
    %cst = arith.constant dense<0.000000e+00> : vector<8xf32>
    %5 = vector.multi_reduction <add>, %4, %cst [1] : vector<8x32xf32> to vector<8xf32>
    %6 = vector.shape_cast %5 : vector<8xf32> to vector<8x1xf32>
    %cst_2 = arith.constant 1.000000e-24 : f32
    %7 = vector.broadcast %cst_2 : f32 to vector<8x1xf32>
    %8 = arith.maximumf %6, %7 : vector<8x1xf32>
    %9 = math.rsqrt %8 : vector<8x1xf32>
    %10 = vector.broadcast %9 : vector<8x1xf32> to vector<8x32xf32>
    %11 = arith.mulf %3, %10 : vector<8x32xf32>
    %c8_i32 = arith.constant 8 : i32
    %12 = arith.muli %arg0, %c8_i32 : i32
    %13 = tpu.assume_multiple %12, 8 : i32
    %14 = arith.index_cast %13 : i32 to index
    %c0_3 = arith.constant 0 : index
    %15 = vector.load %arg1[%14, %c0_3] : memref<8x32xf32, #tpu.memory_space<vmem>>, vector<8x32xf32>
    %16 = arith.mulf %15, %15 : vector<8x32xf32>
    %cst_4 = arith.constant dense<0.000000e+00> : vector<8xf32>
    %17 = vector.multi_reduction <add>, %16, %cst_4 [1] : vector<8x32xf32> to vector<8xf32>
    %18 = vector.shape_cast %17 : vector<8xf32> to vector<8x1xf32>
    %cst_5 = arith.constant 1.000000e-24 : f32
    %19 = vector.broadcast %cst_5 : f32 to vector<8x1xf32>
    %20 = arith.maximumf %18, %19 : vector<8x1xf32>
    %21 = math.rsqrt %20 : vector<8x1xf32>
    %22 = vector.broadcast %21 : vector<8x1xf32> to vector<8x32xf32>
    %23 = arith.mulf %15, %22 : vector<8x32xf32>
    %cst_6 = arith.constant dense<0.000000e+00> : vector<8x8xf32>
    %24 = tpu.matmul %23, %11, %cst_6 {dimension_numbers = #tpu.dot_dimension_numbers<[1], [1], [0], [0], [0, 0, 1, 0], [], []>} : vector<8x32xf32>, vector<8x32xf32>, vector<8x8xf32> -> vector<8x8xf32>
    %c0_7 = arith.constant 0 : index
    %c0_8 = arith.constant 0 : index
    %25 = vector.load %arg2[%c0_7, %c0_8] : memref<8x1xi32, #tpu.memory_space<vmem>>, vector<8x1xi32>
    %c0_9 = arith.constant 0 : index
    %c0_10 = arith.constant 0 : index
    %26 = vector.load %arg3[%c0_9, %c0_10] : memref<1x8xi32, #tpu.memory_space<vmem>>, vector<1x8xi32>
    %27 = vector.broadcast %25 : vector<8x1xi32> to vector<8x8xi32>
    %28 = vector.broadcast %26 : vector<1x8xi32> to vector<8x8xi32>
    %29 = arith.cmpi eq, %27, %28 : vector<8x8xi32>
    %30 = tpu.iota {dimensions = array<i32: 0>} : vector<8x8xi32>
    %31 = vector.broadcast %13 : i32 to vector<8x8xi32>
    %32 = arith.addi %31, %30 : vector<8x8xi32>
    %33 = tpu.iota {dimensions = array<i32: 1>} : vector<8x8xi32>
    %34 = arith.cmpi eq, %32, %33 : vector<8x8xi32>
    %cst_11 = arith.constant dense<true> : vector<8x8xi1>
    %35 = arith.xori %34, %cst_11 : vector<8x8xi1>
    %36 = arith.andi %29, %35 : vector<8x8xi1>
    %cst_12 = arith.constant dense<true> : vector<8x8xi1>
    %37 = arith.xori %29, %cst_12 : vector<8x8xi1>
    %cst_13 = arith.constant -1.000000e+30 : f32
    %38 = vector.broadcast %cst_13 : f32 to vector<8x8xf32>
    %39 = arith.select %37, %24, %38 : vector<8x8xi1>, vector<8x8xf32>
    %cst_14 = arith.constant dense<0xFF800000> : vector<8xf32>
    %40 = vector.multi_reduction <maximumf>, %39, %cst_14 [1] : vector<8x8xf32> to vector<8xf32>
    %41 = vector.shape_cast %40 : vector<8xf32> to vector<8x1xf32>
    %cst_15 = arith.constant 1.000000e+30 : f32
    %42 = vector.broadcast %cst_15 : f32 to vector<8x8xf32>
    %43 = arith.select %36, %24, %42 : vector<8x8xi1>, vector<8x8xf32>
    %cst_16 = arith.constant dense<0x7F800000> : vector<8xf32>
    %44 = vector.multi_reduction <minimumf>, %43, %cst_16 [1] : vector<8x8xf32> to vector<8xf32>
    %45 = vector.shape_cast %44 : vector<8xf32> to vector<8x1xf32>
    %cst_17 = arith.constant 1.000000e-01 : f32
    %46 = vector.broadcast %cst_17 : f32 to vector<8x8xf32>
    %47 = arith.subf %24, %46 : vector<8x8xf32>
    %48 = vector.broadcast %41 : vector<8x1xf32> to vector<8x8xf32>
    %49 = arith.cmpf olt, %47, %48 : vector<8x8xf32>
    %50 = arith.andi %36, %49 : vector<8x8xi1>
    %cst_18 = arith.constant 1.000000e-01 : f32
    %51 = vector.broadcast %cst_18 : f32 to vector<8x8xf32>
    %52 = arith.addf %24, %51 : vector<8x8xf32>
    %53 = vector.broadcast %45 : vector<8x1xf32> to vector<8x8xf32>
    %54 = arith.cmpf ogt, %52, %53 : vector<8x8xf32>
    %55 = arith.andi %37, %54 : vector<8x8xi1>
    %cst_19 = arith.constant 1.000000e-01 : f32
    %56 = vector.broadcast %cst_19 : f32 to vector<8x1xf32>
    %57 = arith.subf %45, %56 : vector<8x1xf32>
    %58 = arith.cmpf olt, %57, %41 : vector<8x1xf32>
    %cst_20 = arith.constant 1.000000e+29 : f32
    %59 = vector.broadcast %cst_20 : f32 to vector<8x1xf32>
    %60 = arith.cmpf olt, %45, %59 : vector<8x1xf32>
    %61 = arith.andi %58, %60 : vector<8x1xi1>
    %cst_21 = arith.constant 1.000000e-01 : f32
    %62 = vector.broadcast %cst_21 : f32 to vector<8x1xf32>
    %63 = arith.addf %41, %62 : vector<8x1xf32>
    %64 = arith.cmpf ogt, %63, %45 : vector<8x1xf32>
    %cst_22 = arith.constant -1.000000e+29 : f32
    %65 = vector.broadcast %cst_22 : f32 to vector<8x1xf32>
    %66 = arith.cmpf ogt, %41, %65 : vector<8x1xf32>
    %67 = arith.andi %64, %66 : vector<8x1xi1>
    %cst_23 = arith.constant 5.000000e-01 : f32
    %68 = vector.broadcast %cst_23 : f32 to vector<8x1xf32>
    %69 = arith.subf %68, %45 : vector<8x1xf32>
    %cst_24 = arith.constant 2.000000e+00 : f32
    %70 = vector.broadcast %cst_24 : f32 to vector<8x1xf32>
    %71 = arith.mulf %70, %69 : vector<8x1xf32>
    %cst_25 = arith.constant 0.000000e+00 : f32
    %72 = vector.broadcast %cst_25 : f32 to vector<8x1xf32>
    %73 = arith.maximumf %71, %72 : vector<8x1xf32>
    %cst_26 = arith.constant 5.000000e-01 : f32
    %74 = vector.broadcast %cst_26 : f32 to vector<8x1xf32>
    %75 = arith.subf %41, %74 : vector<8x1xf32>
    %cst_27 = arith.constant 5.000000e+01 : f32
    %76 = vector.broadcast %cst_27 : f32 to vector<8x1xf32>
    %77 = arith.mulf %76, %75 : vector<8x1xf32>
    %cst_28 = arith.constant 0.000000e+00 : f32
    %78 = vector.broadcast %cst_28 : f32 to vector<8x1xf32>
    %79 = arith.maximumf %77, %78 : vector<8x1xf32>
    %cst_29 = arith.constant 5.000000e-01 : f32
    %80 = vector.broadcast %cst_29 : f32 to vector<8x8xf32>
    %81 = arith.subf %80, %24 : vector<8x8xf32>
    %cst_30 = arith.constant 2.000000e+00 : f32
    %82 = vector.broadcast %cst_30 : f32 to vector<8x8xf32>
    %83 = arith.mulf %82, %81 : vector<8x8xf32>
    %cst_31 = arith.constant -1.000000e+30 : f32
    %84 = vector.broadcast %cst_31 : f32 to vector<8x8xf32>
    %85 = arith.select %50, %83, %84 : vector<8x8xi1>, vector<8x8xf32>
    %cst_32 = arith.constant 5.000000e-01 : f32
    %86 = vector.broadcast %cst_32 : f32 to vector<8x8xf32>
    %87 = arith.subf %24, %86 : vector<8x8xf32>
    %cst_33 = arith.constant 5.000000e+01 : f32
    %88 = vector.broadcast %cst_33 : f32 to vector<8x8xf32>
    %89 = arith.mulf %88, %87 : vector<8x8xf32>
    %cst_34 = arith.constant -1.000000e+30 : f32
    %90 = vector.broadcast %cst_34 : f32 to vector<8x8xf32>
    %91 = arith.select %55, %89, %90 : vector<8x8xi1>, vector<8x8xf32>
    %92 = vector.broadcast %73 : vector<8x1xf32> to vector<8x8xf32>
    %93 = arith.subf %85, %92 : vector<8x8xf32>
    %94 = math.exp %93 : vector<8x8xf32>
    %cst_35 = arith.constant dense<0.000000e+00> : vector<8xf32>
    %95 = vector.multi_reduction <add>, %94, %cst_35 [1] : vector<8x8xf32> to vector<8xf32>
    %96 = vector.shape_cast %95 : vector<8xf32> to vector<8x1xf32>
    %97 = vector.broadcast %79 : vector<8x1xf32> to vector<8x8xf32>
    %98 = arith.subf %91, %97 : vector<8x8xf32>
    %99 = math.exp %98 : vector<8x8xf32>
    %cst_36 = arith.constant dense<0.000000e+00> : vector<8xf32>
    %100 = vector.multi_reduction <add>, %99, %cst_36 [1] : vector<8x8xf32> to vector<8xf32>
    %101 = vector.shape_cast %100 : vector<8xf32> to vector<8x1xf32>
    %cst_37 = arith.constant 0.000000e+00 : f32
    %102 = vector.broadcast %cst_37 : f32 to vector<8x1xf32>
    %103 = arith.subf %102, %73 : vector<8x1xf32>
    %104 = math.exp %103 : vector<8x1xf32>
    %105 = arith.addf %96, %104 : vector<8x1xf32>
    %106 = math.log %105 : vector<8x1xf32>
    %107 = arith.addf %73, %106 : vector<8x1xf32>
    %cst_38 = arith.constant 0.000000e+00 : f32
    %108 = vector.broadcast %cst_38 : f32 to vector<8x1xf32>
    %109 = arith.subf %108, %79 : vector<8x1xf32>
    %110 = math.exp %109 : vector<8x1xf32>
    %111 = arith.addf %101, %110 : vector<8x1xf32>
    %112 = math.log %111 : vector<8x1xf32>
    %113 = arith.addf %79, %112 : vector<8x1xf32>
    %cst_39 = arith.constant 0.000000e+00 : f32
    %114 = vector.broadcast %cst_39 : f32 to vector<8x1xf32>
    %115 = arith.select %61, %107, %114 : vector<8x1xi1>, vector<8x1xf32>
    %cst_40 = arith.constant 5.000000e-01 : f32
    %116 = vector.broadcast %cst_40 : f32 to vector<8x1xf32>
    %117 = arith.mulf %115, %116 : vector<8x1xf32>
    %cst_41 = arith.constant 0.000000e+00 : f32
    %118 = vector.broadcast %cst_41 : f32 to vector<8x1xf32>
    %119 = arith.select %67, %113, %118 : vector<8x1xi1>, vector<8x1xf32>
    %cst_42 = arith.constant 2.000000e-02 : f32
    %120 = vector.broadcast %cst_42 : f32 to vector<8x1xf32>
    %121 = arith.mulf %119, %120 : vector<8x1xf32>
    %c0_43 = arith.constant 0 : index
    %c0_44 = arith.constant 0 : index
    %122 = vector.load %arg4[%c0_43, %c0_44] : memref<1x1xf32, #tpu.memory_space<vmem>>, vector<1x1xf32>
    %123 = arith.addf %117, %121 : vector<8x1xf32>
    %cst_45 = arith.constant dense<0.000000e+00> : vector<1xf32>
    %124 = vector.multi_reduction <add>, %123, %cst_45 [0] : vector<8x1xf32> to vector<1xf32>
    %125 = vector.shape_cast %124 : vector<1xf32> to vector<1x1xf32>
    %126 = arith.addf %122, %125 : vector<1x1xf32>
    %c0_46 = arith.constant 0 : index
    %c0_47 = arith.constant 0 : index
    %127 = vector.load %arg4[%c0_46, %c0_47] : memref<1x1xf32, #tpu.memory_space<vmem>>, vector<1x1xf32>
    tpu.vector_store %arg4[%c0_46, %c0_47], %126 {strides = array<i32>} : memref<1x1xf32, #tpu.memory_space<vmem>>, vector<1x1xf32>,
    %c0_i32_48 = arith.constant 0 : i32
    %128 = arith.cmpi eq, %arg0, %c0_i32_48 : i32
    %129 = arith.extui %128 : i1 to i32
    %c0_i32_49 = arith.constant 0 : i32
    %130 = arith.cmpi ne, %129, %c0_i32_49 : i32
    scf.if %130 {
      %c0_50 = arith.constant 0 : index
      %c0_51 = arith.constant 0 : index
      %131 = vector.load %arg4[%c0_50, %c0_51] : memref<1x1xf32, #tpu.memory_space<vmem>>, vector<1x1xf32>
      %cst_52 = arith.constant 1.250000e-01 : f32
      %132 = vector.broadcast %cst_52 : f32 to vector<1x1xf32>
      %133 = arith.mulf %131, %132 : vector<1x1xf32>
      %c0_53 = arith.constant 0 : index
      %c0_54 = arith.constant 0 : index
      %134 = vector.load %arg4[%c0_53, %c0_54] : memref<1x1xf32, #tpu.memory_space<vmem>>, vector<1x1xf32>
      tpu.vector_store %arg4[%c0_53, %c0_54], %133 {strides = array<i32>} : memref<1x1xf32, #tpu.memory_space<vmem>>, vector<1x1xf32>,
    } else {
    }
    return
  }
  func.func @transform_0(%arg0: i32) -> (i32, i32) {
    %c0_i32 = arith.constant 0 : i32
    %c0_i32_0 = arith.constant 0 : i32
    %c0_i32_1 = arith.constant 0 : i32
    return %c0_i32, %c0_i32_0 : i32, i32
  }
  func.func @transform_1(%arg0: i32) -> (i32, i32) {
    %c0_i32 = arith.constant 0 : i32
    %c0_i32_0 = arith.constant 0 : i32
    return %arg0, %c0_i32 : i32, i32
  }
  func.func @transform_2(%arg0: i32) -> (i32, i32) {
    %c0_i32 = arith.constant 0 : i32
    %c0_i32_0 = arith.constant 0 : i32
    %c0_i32_1 = arith.constant 0 : i32
    return %c0_i32, %c0_i32_0 : i32, i32
  }
  func.func @transform_3(%arg0: i32) -> (i32, i32) {
    %c0_i32 = arith.constant 0 : i32
    %c0_i32_0 = arith.constant 0 : i32
    %c0_i32_1 = arith.constant 0 : i32
    return %c0_i32, %c0_i32_0 : i32, i32
  }
}

</mosaic_0001>

<llo_original>
// kernel: tpu_custom_call.1
$region0: #{tpu_custom_call.1}
  #allocation0 [shape = 'u32[]', space=smem, size = 0x4, offset = 0x4, fixed_abs, tag = 'smem constant byte address 0x4 - core index']
  #allocation1 [shape = 'u32[144,128]{1,0:T(1,128)}', space=vmem, size = 0x12000, scoped, tag = 'internal scratch']
  %s0 = inlined_call_operand.vmem [shape: f32[8,32], index: 0, kind: input, shape index: {}]
  %s1 = inlined_call_operand.vmem [shape: s32[8,1], index: 1, kind: input, shape index: {}]
  %s2 = inlined_call_operand.vmem [shape: s32[1,8], index: 2, kind: input, shape index: {}]
  %s3 = inlined_call_operand.hbm [shape: f32[1,1], index: 3, kind: output, shape index: {}]
  %s4 = sld [smem:[#allocation0]]
  $region30: #{tpu_custom_call.1} parent=0
    _
  %s6 = ssub.s32 1, %s4
  %s7 = scalar_select 0, %s6, %s4
  $region1: #{tpu_custom_call.1} parent=0
    #allocation2 [shape = 'u8[512]{0}', space=vmem, size = 0x400, scoped, tag = 'output window, operand 0, single buffered']
    #allocation3 [shape = 's32[1]{0}', space=sflag, size = 0x4, scoped, tag = 'scoped memory for tpu_custom_call.1']
    %8 = vsyncpa [#allocation3], 0
    // Predicated region
    $region2: #{tpu_custom_call.1} parent=1 // pred_check
      _
    $region3: #{tpu_custom_call.1} parent=1 // pred_check_branch
      %10 = sbr.rel (0) target = $region5
    $region4: #{tpu_custom_call.1} parent=1 // pred_region
      _
    $region5: #{tpu_custom_call.1} parent=1 // pred_fallthru
      _
    // Predicated region
    $region6: #{tpu_custom_call.1} parent=1 // pred_check
      _
    $region7: #{tpu_custom_call.1} parent=1 // pred_check_branch
      %12 = sbr.rel (0) target = $region9
    $region8: #{tpu_custom_call.1} parent=1 // pred_region
      _
    $region9: #{tpu_custom_call.1} parent=1 // pred_fallthru
      _
    // Predicated region
    $region10: #{tpu_custom_call.1} parent=1 // pred_check
      _
    $region11: #{tpu_custom_call.1} parent=1 // pred_check_branch
      %14 = sbr.rel (0) target = $region13
    $region12: #{tpu_custom_call.1} parent=1 // pred_region
      _
    $region13: #{tpu_custom_call.1} parent=1 // pred_fallthru
      _
    %p15 = scmp.eq.s32.totalorder 0, 0
    // Predicated region
    $region14: #{tpu_custom_call.1} parent=1 // pred_check
      %p16 = pneg %p15
    $region15: #{tpu_custom_call.1} parent=1 // pred_check_branch
      %18 = sbr.rel (%p16) target = $region17
    $region16: #{tpu_custom_call.1} parent=1 // pred_region
      %vm19 = vcmask 0
      %20 = vst.msk [vmem:[#allocation2] sm:$0x1] %vm19, 0.0
    $region17: #{tpu_custom_call.1} parent=1 // pred_fallthru
      _
    %v21 = vld [vmem:[%s0] sm:$0xff]
    %v22 = vmul.f32 %v21, %v21
    %vm23 = vcmask 261120
    %v24 = vsel %vm23, %v22, 0.0
    %25 = vadd.xlane.f32.xlu0 %v24
    %v26 = vpop.xlane.xlu0 %25
    %v27 = vmax.f32 %v26, 1e-24
    %v28 = vrsqrt.pop %v27
    %v29 = vmul.f32 %v21, %v28
    %s30 = smul.u32 0, 8
    %s31 = scalar_lea.vmem %s0, %s30
    %v32 = vld [vmem:[%s31] sm:$0xff]
    %v33 = vmul.f32 %v32, %v32
    %v34 = vsel %vm23, %v33, 0.0
    %35 = vadd.xlane.f32.xlu0 %v34
    %v36 = vpop.xlane.xlu0 %35
    %v37 = vmax.f32 %v36, 1e-24
    %v38 = vrsqrt.pop %v37
    %v39 = vmul.f32 %v32, %v38
    %v41 = vsel %vm23, %v39, 0
    %v44 = vsel %vm23, %v29, 0
    %46 = vmatprep.subr.mxu0 0.0
    %47 = vmatpush1.xpose.msra.mxu0 0.0
    %48 = vmatprep.subr.mxu0 0.0
    %49 = vmatpush1.xpose.msra.mxu0 0.0
    %50 = vmatprep.subr.mxu0 0.0
    %51 = vmatpush1.xpose.msra.mxu0 0.0
    %52 = vmatprep.subr.mxu0 0.0
    %53 = vmatpush1.xpose.msra.mxu0 0.0
    %54 = vmatprep.subr.mxu0 0.0
    %55 = vmatpush1.xpose.msra.mxu0 0.0
    %56 = vmatprep.subr.mxu0 0.0
    %57 = vmatpush1.xpose.msra.mxu0 0.0
    %58 = vmatprep.subr.mxu0 0.0
    %59 = vmatpush1.xpose.msra.mxu0 0.0
    %60 = vmatprep.subr.mxu0 0.0
    %61 = vmatpush1.xpose.msra.mxu0 0.0
    %62 = vmatprep.subr.mxu0 0.0
    %63 = vmatpush1.xpose.msra.mxu0 0.0
    %64 = vmatprep.subr.mxu0 0.0
    %65 = vmatpush1.xpose.msra.mxu0 0.0
    %66 = vmatprep.subr.mxu0 0.0
    %67 = vmatpush1.xpose.msra.mxu0 0.0
    %68 = vmatprep.subr.mxu0 0.0
    %69 = vmatpush1.xpose.msra.mxu0 0.0
    %70 = vmatprep.subr.mxu0 0.0
    %71 = vmatpush1.xpose.msra.mxu0 0.0
    %72 = vmatprep.subr.mxu0 0.0
    %73 = vmatpush1.xpose.msra.mxu0 0.0
    %74 = vmatprep.subr.mxu0 0.0
    %75 = vmatpush1.xpose.msra.mxu0 0.0
    %76 = vmatprep.subr.mxu0 0.0
    %77 = vmatpush1.xpose.msra.mxu0 %v44
    %78 = vmatprep.subr.mxu0 0.0
    %79 = vmatpush2.xpose.msra.mxu0 0.0
    %80 = vmatprep.subr.mxu0 0.0
    %81 = vmatpush2.xpose.msra.mxu0 0.0
    %82 = vmatprep.subr.mxu0 0.0
    %83 = vmatpush2.xpose.msra.mxu0 0.0
    %84 = vmatprep.subr.mxu0 0.0
    %85 = vmatpush2.xpose.msra.mxu0 0.0
    %86 = vmatprep.subr.mxu0 0.0
    %87 = vmatpush2.xpose.msra.mxu0 0.0
    %88 = vmatprep.subr.mxu0 0.0
    %89 = vmatpush2.xpose.msra.mxu0 0.0
    %90 = vmatprep.subr.mxu0 0.0
    %91 = vmatpush2.xpose.msra.mxu0 0.0
    %92 = vmatprep.subr.mxu0 0.0
    %93 = vmatpush2.xpose.msra.mxu0 0.0
    %94 = vmatprep.subr.mxu0 0.0
    %95 = vmatpush2.xpose.msra.mxu0 0.0
    %96 = vmatprep.subr.mxu0 0.0
    %97 = vmatpush2.xpose.msra.mxu0 0.0
    %98 = vmatprep.subr.mxu0 0.0
    %99 = vmatpush2.xpose.msra.mxu0 0.0
    %100 = vmatprep.subr.mxu0 0.0
    %101 = vmatpush2.xpose.msra.mxu0 0.0
    %102 = vmatprep.subr.mxu0 0.0
    %103 = vmatpush2.xpose.msra.mxu0 0.0
    %104 = vmatprep.subr.mxu0 0.0
    %105 = vmatpush2.xpose.msra.mxu0 0.0
    %106 = vmatprep.subr.mxu0 0.0
    %107 = vmatpush2.xpose.msra.mxu0 0.0
    %108 = vmatprep.subr.mxu0 0.0
    %109 = vmatpush2.xpose.msra.mxu0 0.0
    %110 = vmatprep.mubr.f32.mxu0 0.0
    %111 = vmatmul.mubr.f32.gmra.mxu0 %v41
    %v112 = vpop.f32.mrf.mxu0
    %v113 = vadd.f32 0.0, %v112
    %v114 = vpop.f32.mrf.mxu0
    %115 = vdwg.mxu0
    %v116 = vld [vmem:[%s1] sm:$0xff]
    %v117 = vld [vmem:[%s2] sm:$0x1]
    %118 = vset.pattern.permute.xlu0 0
    %119 = vperm.xlu0 %118, %v116
    %v120 = vpop.permute.xlu0 %119
    %v121 = vlaneseq
    %v122 = vshrl.u32 %v121, 7
    %v123 = vsub.s32 0, %v122
    %v124 = vrot.slane %v117, %v123
    %vm125 = vcmp.eq.s32.totalorder %v120, %v124
    %v126 = vlaneseq
    %v127 = vshrl.u32 %v126, 7
    %v128 = vstv %s30
    %v129 = vadd.s32 %v128, %v127
    %v130 = vlaneseq
    %v131 = vand.u32 %v130, 127
    %vm132 = vcmp.eq.s32.totalorder %v129, %v131
    %vm133 = vmxor %vm132, 1
    %vm134 = vmand %vm125, %vm133
    %vm135 = vmxor %vm125, 1
    %v136 = vsel %vm135, %v113, -1e+30
    %vm137 = vcmask 64512
    %v138 = vsel %vm137, %v136, -inf
    %139 = vmax.xlane.f32.xlu0 %v138
    %v140 = vpop.xlane.xlu0 %139
    %v141 = vsel %vm134, %v113, 1e+30
    %v142 = vsel %vm137, %v141, inf
    %143 = vmin.xlane.f32.xlu0 %v142
    %v144 = vpop.xlane.xlu0 %143
    %v145 = vsub.f32 %v113, 0.1
    %vm146 = vcmp.lt.f32.partialorder %v145, %v140
    %vm147 = vmand %vm134, %vm146
    %v148 = vadd.f32 %v113, 0.1
    %vm149 = vcmp.gt.f32.partialorder %v148, %v144
    %vm150 = vmand %vm135, %vm149
    %v151 = vsub.f32 %v144, 0.1
    %vm152 = vcmp.lt.f32.partialorder %v151, %v140
    %vm153 = vcmp.lt.f32.partialorder %v144, 1e+29
    %vm154 = vmand %vm152, %vm153
    %v155 = vadd.f32 %v140, 0.1
    %vm156 = vcmp.gt.f32.partialorder %v155, %v144
    %vm157 = vcmp.gt.f32.partialorder %v140, -1e+29
    %vm158 = vmand %vm156, %vm157
    %v159 = vsub.f32 0.5, %v144
    %v160 = vmul.f32 %v159, 2.0
    %v161 = vmax.f32 %v160, 0.0
    %v162 = vsub.f32 %v140, 0.5
    %v163 = vmul.f32 %v162, 50.0
    %v164 = vmax.f32 %v163, 0.0
    %v165 = vsub.f32 0.5, %v113
    %v166 = vmul.f32 %v165, 2.0
    %v167 = vsel %vm147, %v166, -1e+30
    %v168 = vsub.f32 %v113, 0.5
    %v169 = vmul.f32 %v168, 50.0
    %v170 = vsel %vm150, %v169, -1e+30
    %v171 = vsub.f32 %v167, %v161
    %v172 = vmul.f32 %v171, 1.442695
    %v173 = vpow.pop %v172
    %v174 = vsel %vm137, %v173, 0.0
    %175 = vadd.xlane.f32.xlu0 %v174
    %v176 = vpop.xlane.xlu0 %175
    %v177 = vsub.f32 %v170, %v164
    %v178 = vmul.f32 %v177, 1.442695
    %v179 = vpow.pop %v178
    %v180 = vsel %vm137, %v179, 0.0
    %181 = vadd.xlane.f32.xlu0 %v180
    %v182 = vpop.xlane.xlu0 %181
    %v183 = vsub.f32 0.0, %v161
    %v184 = vmul.f32 %v183, 1.442695
    %v185 = vpow.pop %v184
    %v186 = vadd.f32 %v176, %v185
    %v187 = vlog2.pop %v186
    %v188 = vmul.f32 %v187, 0.6931472
    %v189 = vadd.f32 %v161, %v188
    %v190 = vsub.f32 0.0, %v164
    %v191 = vmul.f32 %v190, 1.442695
    %v192 = vpow.pop %v191
    %v193 = vadd.f32 %v182, %v192
    %v194 = vlog2.pop %v193
    %v195 = vmul.f32 %v194, 0.6931472
    %v196 = vadd.f32 %v164, %v195
    %v197 = vsel %vm154, %v189, 0.0
    %v198 = vmul.f32 %v197, 0.5
    %v199 = vsel %vm158, %v196, 0.0
    %v200 = vmul.f32 %v199, 0.02
    %v201 = vld [vmem:[#allocation2] sm:$0x1]
    %v202 = vadd.f32 %v198, %v200
    %v203 = vrot.slane %v202, 4
    %v204 = vadd.f32 %v202, %v203
    %v205 = vrot.slane %v204, 2
    %v206 = vadd.f32 %v204, %v205
    %v207 = vrot.slane %v206, 1
    %v208 = vadd.f32 %v206, %v207
    %v209 = vadd.f32 %v201, %v208
    %vm210 = vcmask 0
    %211 = vst.msk [vmem:[#allocation2] sm:$0x1] %vm210, %v209
    // Predicated region
    $region18: #{tpu_custom_call.1} parent=1 // pred_check
      %p212 = pneg %p15
    $region19: #{tpu_custom_call.1} parent=1 // pred_check_branch
      %214 = sbr.rel (%p212) target = $region21
    $region20: #{tpu_custom_call.1} parent=1 // pred_region
      %v215 = vld [vmem:[#allocation2] sm:$0x1]
      %v216 = vmul.f32 %v215, 0.125
      %217 = vst.msk [vmem:[#allocation2] sm:$0x1] %vm210, %v216
    $region21: #{tpu_custom_call.1} parent=1 // pred_fallthru
      _
    // Predicated region
    $region22: #{tpu_custom_call.1} parent=1 // pred_check
      _
    $region23: #{tpu_custom_call.1} parent=1 // pred_check_branch
      %219 = sbr.rel (0) target = $region25
    $region24: #{tpu_custom_call.1} parent=1 // pred_region
      %s221 = ssub.s32 16, 16
      %222 = vsyncadd [#allocation3], %s221
      %s224 = sshll.u32 [#allocation2], 4
      %s225 = int_to_ptr.vmem [resolvable:$true] %s224
      %227 = dma.vmem_to_hbm [thread:$0]  %s225, 16, %s3, [#allocation3]
    $region25: #{tpu_custom_call.1} parent=1 // pred_fallthru
      _
    // Predicated region
    $region26: #{tpu_custom_call.1} parent=1 // pred_check
      _
    $region27: #{tpu_custom_call.1} parent=1 // pred_check_branch
      %229 = sbr.rel (0) target = $region29
    $region28: #{tpu_custom_call.1} parent=1 // pred_region
      %230 = dma.done [#allocation3], 16
    $region29: #{tpu_custom_call.1} parent=1 // pred_fallthru
      _
    %231 = vsyncpa [#allocation3], 1

</llo_original>
